<compile_context>
chip_gen: v5e
topology: v5e:2x2
jax: 0.10.0
libtpu: 0.0.40
codegen_flags: <defaults>
</compile_context>

<pallas_src>
import jax
import jax.numpy as jnp
import numpy as np
from jax.experimental import pallas as pl
from jax.experimental.pallas import tpu as pltpu


def _round_up(v, m):
    return ((v + m - 1) // m) * m


def _x_index_map(i):
    return (i, 0)


def _resident_index_map(i):
    return (0, 0)


def _row_out_index_map(i):
    return (i, 0, 0)


def make_deep_kernel(n_layers, reduce_last, compute_dtype):
    """Kernel for an MLP with `n_layers` Linear layers.

    reduce_last: last layer has d_out == 1 and its weight arrives as a
    [1, d_in] row -> computed as a VPU multiply + lane reduction (MXU stays
    free) and stored lane-dense as a [1, TILE_B] row.
    """
    compute_dtype = jnp.dtype(compute_dtype)
    is_f32_compute = compute_dtype == jnp.dtype(jnp.float32)

    def kernel(*refs):
        # refs = (x, w0, b0, w1, b1, ..., out)
        x_ref = refs[0]
        params = refs[1:1 + 2 * n_layers]
        out_ref = refs[-1]

        x = x_ref[...]                      # already in compute dtype (no cast)

        for i in range(n_layers):
            w = params[2 * i][...]          # [d_in, d_out] (or [1, d_in] row)
            b = params[2 * i + 1][...]      # [1, d_out] f32 -> broadcasts over batch
            is_last = i == n_layers - 1

            if is_last and reduce_last:
                # d_out == 1 head: VPU mul + lane reduce, then one small XLU
                # transpose so the store is a lane-dense [1, TILE_B] row
                # instead of a 1/128-lane masked [TILE_B, 1] column.
                xf = x if is_f32_compute else x.astype(jnp.float32)
                wf = w if w.dtype == jnp.float32 else w.astype(jnp.float32)
                col = jnp.sum(xf * wf, axis=-1, keepdims=True) + b   # [tb, 1] f32
                row = jnp.transpose(col, (1, 0))                     # [1, tb]
                out_ref[...] = row.reshape(out_ref.shape).astype(out_ref.dtype)
            else:
                # MXU matmul with f32 accumulation; bias add / ReLU in f32.
                y = jnp.dot(x, w, preferred_element_type=jnp.float32) + b
                if is_last:
                    out_ref[...] = y.astype(out_ref.dtype)
                else:
                    y = jnp.maximum(y, 0.0)
                    x = y if is_f32_compute else y.astype(compute_dtype)

        # Dropout p=0.0 -> identity.
        # TODO(synk): p>0 training-mode dropout would need pltpu.prng_seed /
        # pltpu.prng_random_bits; not implemented (module default is p=0.0).

    return kernel


def deep_forward(x, weights, biases, *, dropout=0.0, tile_b=2048,
                 compute_dtype=jnp.float32, ensure_two_grid_steps=True):
    """
    x       : [B, D0] float
    weights : list of [d_in, d_out] float32 (transpose of PyTorch's [out, in])
    biases  : list of [d_out] float32
    returns : [B, d_last] float32
    """
    assert dropout == 0.0, "only p=0.0 (identity) dropout is supported"
    compute_dtype = jnp.dtype(compute_dtype)
    B, D0 = x.shape
    n_layers = len(weights)
    d_last = weights[-1].shape[1]
    reduce_last = (d_last == 1)

    # ---- batch tile --------------------------------------------------------
    tb = max(1, min(int(tile_b), B))
    # Give the "parallel" grid axis >= 2 steps so both TensorCores are fed on
    # v7x megacore; costs at most one extra (~0.35 us) step on 1-TC chips.
    if ensure_two_grid_steps and B >= 256:
        tb = min(tb, -(-B // 2))
    if tb < B:
        tb = _round_up(tb, 8)      # (8, 128) block constraint on partial tiles
    if tb >= B:
        tb = B                     # full-extent block is always legal
    nb = -(-B // tb)               # ragged final block -> Pallas masks the writes

    # ---- operand prep (plain JAX glue) --------------------------------------
    x_op = x.astype(compute_dtype)       # bf16 compute => half the x DMA bytes
    w_ops, b_ops = [], []
    for li, (w, b) in enumerate(zip(weights, biases)):
        if li == n_layers - 1 and reduce_last:
            # last layer as a [1, d_in] row for the VPU mul+reduce path
            w_ops.append(w.reshape(1, -1).astype(compute_dtype))
        else:
            w_ops.append(w.astype(compute_dtype))
        b_ops.append(b.reshape(1, -1).astype(jnp.float32))

    operands = [x_op]
    in_specs = [pl.BlockSpec((tb, D0), _x_index_map)]
    for w2d, b2d in zip(w_ops, b_ops):
        operands.append(w2d)
        in_specs.append(pl.BlockSpec(w2d.shape, _resident_index_map))
        operands.append(b2d)
        in_specs.append(pl.BlockSpec(b2d.shape, _resident_index_map))

    if reduce_last:
        # Lane-dense output: one [1, TILE_B] row per grid step.
        out_shape = jax.ShapeDtypeStruct((nb, 1, tb), jnp.float32)
        out_spec = pl.BlockSpec((1, 1, tb), _row_out_index_map)
    else:
        out_shape = jax.ShapeDtypeStruct((B, d_last), jnp.float32)
        out_spec = pl.BlockSpec((tb, d_last), _x_index_map)

    # ---- VMEM budget: size it to the real footprint (v7x has only 64 MiB) ---
    c_item = compute_dtype.itemsize
    max_hidden = max(w.shape[1] for w in weights)
    est = 2 * tb * D0 * c_item                             # double-buffered x tile
    est += 2 * (tb if reduce_last else tb * d_last) * 4    # double-buffered out tile
    est += 2 * sum(int(w.size) * c_item for w in w_ops)    # resident weights
    est += 2 * sum(int(b.size) * 4 for b in b_ops)         # resident biases
    est += 2 * tb * max_hidden * 4                         # intermediate activations
    vmem_limit = int(min(max(est + (4 << 20), 8 << 20), 48 << 20))

    kernel = make_deep_kernel(n_layers, reduce_last, compute_dtype)

    out = pl.pallas_call(
        kernel,
        out_shape=out_shape,
        grid=(nb,),
        in_specs=in_specs,
        out_specs=out_spec,
        compiler_params=pltpu.CompilerParams(
            dimension_semantics=("parallel",),
            vmem_limit_bytes=vmem_limit,
        ),
    )(*operands)

    if reduce_last:
        out = out.reshape(nb * tb, 1)[:B]   # cheap layout plumbing back to (B, 1)
    return out


# ------------------------------ pure-JAX reference ---------------------------
def deep_forward_ref(x, weights, biases):
    n = len(weights)
    x = x.astype(jnp.float32)
    for i, (w, b) in enumerate(zip(weights, biases)):
        x = x @ w + b
        if i < n - 1:
            x = jnp.maximum(x, 0.0)
    return x


def _make_params(key, hidden_units):
    """nn.Linear-style init; weights stored as [d_in, d_out]."""
    weights, biases = [], []
    keys = jax.random.split(key, 2 * (len(hidden_units) - 1))
    for li, (d_in, d_out) in enumerate(zip(hidden_units[:-1], hidden_units[1:])):
        bound = 1.0 / np.sqrt(d_in)
        w = jax.random.uniform(keys[2 * li], (d_in, d_out), jnp.float32,
                               -bound, bound)
        b = jax.random.uniform(keys[2 * li + 1], (d_out,), jnp.float32,
                               -bound, bound)
        weights.append(w)
        biases.append(b)
    return weights, biases


if __name__ == "__main__":
    key = jax.random.PRNGKey(0)
    k_a, k_b, kp_a, kp_b = jax.random.split(key, 4)

    # --- config A: d_out == 1 head (lane-dense row-output path), B=512 ->
    #     grid of 2 parallel steps of 256 rows each.
    hidden_a = [32, 64, 32, 1]
    B_a = 512
    x_a = jax.random.normal(k_a, (B_a, hidden_a[0]), dtype=jnp.float32)
    w_a, bias_a = _make_params(kp_a, hidden_a)

    out_a = jax.block_until_ready(deep_forward(x_a, w_a, bias_a))
    ref_a = deep_forward_ref(x_a, w_a, bias_a)
    assert out_a.shape == (B_a, 1)
    np.testing.assert_allclose(np.asarray(out_a), np.asarray(ref_a),
                               rtol=1e-5, atol=1e-5)

    # Same config with bf16 MXU operands (f32 accumulate) — looser tolerance.
    out_a16 = jax.block_until_ready(
        deep_forward(x_a, w_a, bias_a, compute_dtype=jnp.bfloat16))
    np.testing.assert_allclose(np.asarray(out_a16), np.asarray(ref_a),
                               rtol=2e-2, atol=2e-2)

    # --- config B: generic last layer (d_out > 1) with a ragged final block
    #     (B=200, tile 128 -> second grid step partially masked, no jnp.pad).
    hidden_b = [32, 48, 16]
    B_b = 200
    x_b = jax.random.normal(k_b, (B_b, hidden_b[0]), dtype=jnp.float32)
    w_b, bias_b = _make_params(kp_b, hidden_b)

    out_b = jax.block_until_ready(deep_forward(x_b, w_b, bias_b, tile_b=128))
    ref_b = deep_forward_ref(x_b, w_b, bias_b)
    np.testing.assert_allclose(np.asarray(out_b), np.asarray(ref_b),
                               rtol=1e-5, atol=1e-5)

    print("KERNEL_OK")
</pallas_src>

<mosaic_0001>
module attributes {stable_mosaic.version = 11 : i64} {
  func.func @kernel(%arg0: i32, %arg1: memref<256x32xf32, #tpu.memory_space<vmem>>, %arg2: memref<32x64xf32, #tpu.memory_space<vmem>>, %arg3: memref<1x64xf32, #tpu.memory_space<vmem>>, %arg4: memref<64x32xf32, #tpu.memory_space<vmem>>, %arg5: memref<1x32xf32, #tpu.memory_space<vmem>>, %arg6: memref<1x32xf32, #tpu.memory_space<vmem>>, %arg7: memref<1x1xf32, #tpu.memory_space<vmem>>, %arg8: memref<1x1x256xf32, #tpu.memory_space<vmem>>) attributes {dimension_semantics = [#tpu.dimension_semantics<parallel>], iteration_bounds = array<i64: 2>, scalar_prefetch = 0 : i64, scratch_operands = 0 : i64, tpu.core_type = #tpu.core_type<tc>, window_params = [{transform_indices = @transform_0, window_bounds = array<i64: 256, 32>}, {pipeline_mode = #tpu.pipeline_mode<synchronous>, transform_indices = @transform_1, window_bounds = array<i64: 32, 64>}, {pipeline_mode = #tpu.pipeline_mode<synchronous>, transform_indices = @transform_2, window_bounds = array<i64: 1, 64>}, {pipeline_mode = #tpu.pipeline_mode<synchronous>, transform_indices = @transform_3, window_bounds = array<i64: 64, 32>}, {pipeline_mode = #tpu.pipeline_mode<synchronous>, transform_indices = @transform_4, window_bounds = array<i64: 1, 32>}, {pipeline_mode = #tpu.pipeline_mode<synchronous>, transform_indices = @transform_5, window_bounds = array<i64: 1, 32>}, {pipeline_mode = #tpu.pipeline_mode<synchronous>, transform_indices = @transform_6, window_bounds = array<i64: 1, 1>}, {transform_indices = @transform_7, window_bounds = array<i64: 1, 1, 256>}]} {
    %c0 = arith.constant 0 : index
    %c0_0 = arith.constant 0 : index
    %0 = vector.load %arg1[%c0, %c0_0] : memref<256x32xf32, #tpu.memory_space<vmem>>, vector<256x32xf32>
    %c0_1 = arith.constant 0 : index
    %c0_2 = arith.constant 0 : index
    %1 = vector.load %arg2[%c0_1, %c0_2] : memref<32x64xf32, #tpu.memory_space<vmem>>, vector<32x64xf32>
    %c0_3 = arith.constant 0 : index
    %c0_4 = arith.constant 0 : index
    %2 = vector.load %arg3[%c0_3, %c0_4] : memref<1x64xf32, #tpu.memory_space<vmem>>, vector<1x64xf32>
    %cst = arith.constant dense<0.000000e+00> : vector<256x64xf32>
    %3 = tpu.matmul %0, %1, %cst {dimension_numbers = #tpu.dot_dimension_numbers<[1], [0], [0], [1], [0, 0, 1, 1], [], []>} : vector<256x32xf32>, vector<32x64xf32>, vector<256x64xf32> -> vector<256x64xf32>
    %4 = vector.broadcast %2 : vector<1x64xf32> to vector<256x64xf32>
    %5 = arith.addf %3, %4 : vector<256x64xf32>
    %cst_5 = arith.constant 0.000000e+00 : f32
    %6 = vector.broadcast %cst_5 : f32 to vector<256x64xf32>
    %7 = arith.maximumf %5, %6 : vector<256x64xf32>
    %c0_6 = arith.constant 0 : index
    %c0_7 = arith.constant 0 : index
    %8 = vector.load %arg4[%c0_6, %c0_7] : memref<64x32xf32, #tpu.memory_space<vmem>>, vector<64x32xf32>
    %c0_8 = arith.constant 0 : index
    %c0_9 = arith.constant 0 : index
    %9 = vector.load %arg5[%c0_8, %c0_9] : memref<1x32xf32, #tpu.memory_space<vmem>>, vector<1x32xf32>
    %cst_10 = arith.constant dense<0.000000e+00> : vector<256x32xf32>
    %10 = tpu.matmul %7, %8, %cst_10 {dimension_numbers = #tpu.dot_dimension_numbers<[1], [0], [0], [1], [0, 0, 1, 1], [], []>} : vector<256x64xf32>, vector<64x32xf32>, vector<256x32xf32> -> vector<256x32xf32>
    %11 = vector.broadcast %9 : vector<1x32xf32> to vector<256x32xf32>
    %12 = arith.addf %10, %11 : vector<256x32xf32>
    %cst_11 = arith.constant 0.000000e+00 : f32
    %13 = vector.broadcast %cst_11 : f32 to vector<256x32xf32>
    %14 = arith.maximumf %12, %13 : vector<256x32xf32>
    %c0_12 = arith.constant 0 : index
    %c0_13 = arith.constant 0 : index
    %15 = vector.load %arg6[%c0_12, %c0_13] : memref<1x32xf32, #tpu.memory_space<vmem>>, vector<1x32xf32>
    %c0_14 = arith.constant 0 : index
    %c0_15 = arith.constant 0 : index
    %16 = vector.load %arg7[%c0_14, %c0_15] : memref<1x1xf32, #tpu.memory_space<vmem>>, vector<1x1xf32>
    %17 = vector.broadcast %15 : vector<1x32xf32> to vector<256x32xf32>
    %18 = arith.mulf %14, %17 : vector<256x32xf32>
    %cst_16 = arith.constant dense<0.000000e+00> : vector<256xf32>
    %19 = vector.multi_reduction <add>, %18, %cst_16 [1] : vector<256x32xf32> to vector<256xf32>
    %20 = vector.shape_cast %19 : vector<256xf32> to vector<256x1xf32>
    %21 = vector.broadcast %16 : vector<1x1xf32> to vector<256x1xf32>
    %22 = arith.addf %20, %21 : vector<256x1xf32>
    %23 = tpu.transpose %22, [1, 0] : vector<256x1xf32> -> vector<1x256xf32>
    %24 = vector.shape_cast %23 : vector<1x256xf32> to vector<1x1x256xf32>
    %c0_17 = arith.constant 0 : index
    %c0_18 = arith.constant 0 : index
    %c0_19 = arith.constant 0 : index
    %25 = vector.load %arg8[%c0_17, %c0_18, %c0_19] : memref<1x1x256xf32, #tpu.memory_space<vmem>>, vector<1x1x256xf32>
    tpu.vector_store %arg8[%c0_17, %c0_18, %c0_19], %24 {strides = array<i32>} : memref<1x1x256xf32, #tpu.memory_space<vmem>>, vector<1x1x256xf32>,
    return
  }
  func.func @transform_0(%arg0: i32) -> (i32, i32) {
    %c0_i32 = arith.constant 0 : i32
    %c0_i32_0 = arith.constant 0 : i32
    return %arg0, %c0_i32 : i32, i32
  }
  func.func @transform_1(%arg0: i32) -> (i32, i32) {
    %c0_i32 = arith.constant 0 : i32
    %c0_i32_0 = arith.constant 0 : i32
    %c0_i32_1 = arith.constant 0 : i32
    return %c0_i32, %c0_i32_0 : i32, i32
  }
  func.func @transform_2(%arg0: i32) -> (i32, i32) {
    %c0_i32 = arith.constant 0 : i32
    %c0_i32_0 = arith.constant 0 : i32
    %c0_i32_1 = arith.constant 0 : i32
    return %c0_i32, %c0_i32_0 : i32, i32
  }
  func.func @transform_3(%arg0: i32) -> (i32, i32) {
    %c0_i32 = arith.constant 0 : i32
    %c0_i32_0 = arith.constant 0 : i32
    %c0_i32_1 = arith.constant 0 : i32
    return %c0_i32, %c0_i32_0 : i32, i32
  }
  func.func @transform_4(%arg0: i32) -> (i32, i32) {
    %c0_i32 = arith.constant 0 : i32
    %c0_i32_0 = arith.constant 0 : i32
    %c0_i32_1 = arith.constant 0 : i32
    return %c0_i32, %c0_i32_0 : i32, i32
  }
  func.func @transform_5(%arg0: i32) -> (i32, i32) {
    %c0_i32 = arith.constant 0 : i32
    %c0_i32_0 = arith.constant 0 : i32
    %c0_i32_1 = arith.constant 0 : i32
    return %c0_i32, %c0_i32_0 : i32, i32
  }
  func.func @transform_6(%arg0: i32) -> (i32, i32) {
    %c0_i32 = arith.constant 0 : i32
    %c0_i32_0 = arith.constant 0 : i32
    %c0_i32_1 = arith.constant 0 : i32
    return %c0_i32, %c0_i32_0 : i32, i32
  }
  func.func @transform_7(%arg0: i32) -> (i32, i32, i32) {
    %c0_i32 = arith.constant 0 : i32
    %c0_i32_0 = arith.constant 0 : i32
    %c0_i32_1 = arith.constant 0 : i32
    return %arg0, %c0_i32, %c0_i32_0 : i32, i32, i32
  }
}

</mosaic_0001>

<llo_original>
// kernel: tpu_custom_call.1
$region0: #{tpu_custom_call.1}
  #allocation0 [shape = 'u32[]', space=smem, size = 0x4, offset = 0x4, fixed_abs, tag = 'smem constant byte address 0x4 - core index']
  #allocation1 [shape = 'u32[72,128]{1,0:T(1,128)}', space=vmem, size = 0x9000, scoped, tag = 'internal scratch']
  #allocation2 [shape = 'f32[1,1]{1,0:T(1,128)S(1)}', space=vmem, size = 0x200, scoped, tag = 'scoped memory for tpu_custom_call.1']
  %s0 = inlined_call_operand.vmem [shape: f32[512,32], index: 0, kind: input, shape index: {}]
  %s1 = inlined_call_operand.vmem [shape: f32[32,64], index: 1, kind: input, shape index: {}]
  %s2 = inlined_call_operand.vmem [shape: f32[1,64], index: 2, kind: input, shape index: {}]
  %s3 = inlined_call_operand.vmem [shape: f32[64,32], index: 3, kind: input, shape index: {}]
  %s4 = inlined_call_operand.vmem [shape: f32[1,32], index: 4, kind: input, shape index: {}]
  %s5 = inlined_call_operand.vmem [shape: f32[1,32], index: 5, kind: input, shape index: {}]
  %s6 = inlined_call_operand.<no memory space> [shape: f32[1,1], index: 6, kind: input, shape index: {}]
  %s7 = inlined_call_operand.hbm [shape: f32[2,1,256], index: 7, kind: output, shape index: {}]
  %s8 = sld [smem:[#allocation0]]
  $region61: #{tpu_custom_call.1} parent=0
    _
  %s10 = ssub.s32 1, %s8
  %s11 = scalar_select 0, %s10, %s8
  %v12 = vstv %s6
  %13 = vst [vmem:[#allocation2] sm:$0x1] %v12
  $region1: #{tpu_custom_call.1} parent=0
    #allocation3 [shape = 'u8[2048]{0}', space=vmem, size = 0x800, scoped, tag = 'output window, operand 0']
    #allocation4 [shape = 's32[2]{0}', space=sflag, size = 0x8, scoped, tag = 'scoped memory for tpu_custom_call.1']
    %14 = vsyncpa [#allocation4], 0
    %s15 = scalar_lea.sflag [#allocation4], 1
    %16 = vsyncpa %s15, 0
    loop: start=0, step=1, limit=4
    $region2: #{tpu_custom_call.1} parent=1 // loop_pre_header
      _
    $region3: #{tpu_custom_call.1} parent=1 // loop_header
      %s18 = sphi 0, %s22
      %p19 = scmp.ge.s32.totalorder %s18, 4
      %s28 = sphi 0, %s30
      %s31 = sphi 0, %s28
      %s32 = sphi 0, %s31
      %s48 = sphi 0, %s32
      %s52 = sphi 0, %s52
      %s54 = sphi 0, %s52
      %s55 = sphi 0, %s54
      %s69 = sphi 0, %s55
      %s73 = sphi 0, %s73
      %s75 = sphi 0, %s73
      %s76 = sphi 0, %s75
      %s90 = sphi 0, %s76
      %s94 = sphi 0, %s94
      %s96 = sphi 0, %s94
      %s97 = sphi 0, %s96
      %s111 = sphi 0, %s97
      %s115 = sphi 0, %s115
      %s117 = sphi 0, %s115
      %s118 = sphi 0, %s117
      %s132 = sphi 0, %s118
      %s136 = sphi 0, %s136
      %s138 = sphi 0, %s136
      %s139 = sphi 0, %s138
      %s153 = sphi 0, %s139
      %s157 = sphi 0, %s157
      %s159 = sphi 0, %s157
      %s160 = sphi 0, %s159
      %s174 = sphi 0, %s160
      %s180 = sphi 0, %s182
      %s183 = sphi 0, %s180
      %s184 = sphi 0, %s183
      %s200 = sphi 0, %s184
    $region4: #{tpu_custom_call.1} parent=1 // loop_header_branch
      %21 = sbr.rel (%p19) target = $region8
    $region5: #{tpu_custom_call.1} parent=1 // loop_body
      %s23 = ssub.s32 %s18, 1
      %s24 = ssub.s32 %s18, 2
      %s25 = sadd.s32 %s18, 1
      %s26 = ssub.s32 %s18, %s25
      %p27 = scmp.eq.s32.totalorder %s26, 0
      %s29 = sadd.s32 %s28, 1
      %s30 = scalar_select %p27, %s28, %s29
      %p33 = pneg %p27
      %p34 = scmp.eq.s32.totalorder %s18, 1
      %p35 = por %p33, %p34
      %p36 = scmp.ne.s32.totalorder %s28, %s31
      %p37 = scmp.eq.s32.totalorder %s18, 0
      %p38 = por %p36, %p37
      %p39 = scmp.ne.s32.totalorder %s28, %s31
      %p40 = scmp.eq.s32.totalorder %s23, 1
      %p41 = por %p39, %p40
      %p42 = scmp.ne.s32.totalorder %s31, %s32
      %p43 = scmp.eq.s32.totalorder %s23, 0
      %p44 = por %p42, %p43
      %p45 = scmp.ne.s32.totalorder %s31, %s32
      %p46 = scmp.eq.s32.totalorder %s24, 1
      %p47 = por %p45, %p46
      %p49 = scmp.ne.s32.totalorder %s32, %s48
      %p50 = scmp.eq.s32.totalorder %s24, 0
      %p51 = por %p49, %p50
      %s53 = sadd.s32 %s52, 1
      %p56 = scmp.eq.s32.totalorder %s18, 1
      %p57 = scmp.ne.s32.totalorder %s52, %s54
      %p58 = scmp.eq.s32.totalorder %s18, 0
      %p59 = por %p57, %p58
      %p60 = scmp.ne.s32.totalorder %s52, %s54
      %p61 = scmp.eq.s32.totalorder %s23, 1
      %p62 = por %p60, %p61
      %p63 = scmp.ne.s32.totalorder %s54, %s55
      %p64 = scmp.eq.s32.totalorder %s23, 0
      %p65 = por %p63, %p64
      %p66 = scmp.ne.s32.totalorder %s54, %s55
      %p67 = scmp.eq.s32.totalorder %s24, 1
      %p68 = por %p66, %p67
      %p70 = scmp.ne.s32.totalorder %s55, %s69
      %p71 = scmp.eq.s32.totalorder %s24, 0
      %p72 = por %p70, %p71
      %s74 = sadd.s32 %s73, 1
      %p77 = scmp.eq.s32.totalorder %s18, 1
      %p78 = scmp.ne.s32.totalorder %s73, %s75
      %p79 = scmp.eq.s32.totalorder %s18, 0
      %p80 = por %p78, %p79
      %p81 = scmp.ne.s32.totalorder %s73, %s75
      %p82 = scmp.eq.s32.totalorder %s23, 1
      %p83 = por %p81, %p82
      %p84 = scmp.ne.s32.totalorder %s75, %s76
      %p85 = scmp.eq.s32.totalorder %s23, 0
      %p86 = por %p84, %p85
      %p87 = scmp.ne.s32.totalorder %s75, %s76
      %p88 = scmp.eq.s32.totalorder %s24, 1
      %p89 = por %p87, %p88
      %p91 = scmp.ne.s32.totalorder %s76, %s90
      %p92 = scmp.eq.s32.totalorder %s24, 0
      %p93 = por %p91, %p92
      %s95 = sadd.s32 %s94, 1
      %p98 = scmp.eq.s32.totalorder %s18, 1
      %p99 = scmp.ne.s32.totalorder %s94, %s96
      %p100 = scmp.eq.s32.totalorder %s18, 0
      %p101 = por %p99, %p100
      %p102 = scmp.ne.s32.totalorder %s94, %s96
      %p103 = scmp.eq.s32.totalorder %s23, 1
      %p104 = por %p102, %p103
      %p105 = scmp.ne.s32.totalorder %s96, %s97
      %p106 = scmp.eq.s32.totalorder %s23, 0
      %p107 = por %p105, %p106
      %p108 = scmp.ne.s32.totalorder %s96, %s97
      %p109 = scmp.eq.s32.totalorder %s24, 1
      %p110 = por %p108, %p109
      %p112 = scmp.ne.s32.totalorder %s97, %s111
      %p113 = scmp.eq.s32.totalorder %s24, 0
      %p114 = por %p112, %p113
      %s116 = sadd.s32 %s115, 1
      %p119 = scmp.eq.s32.totalorder %s18, 1
      %p120 = scmp.ne.s32.totalorder %s115, %s117
      %p121 = scmp.eq.s32.totalorder %s18, 0
      %p122 = por %p120, %p121
      %p123 = scmp.ne.s32.totalorder %s115, %s117
      %p124 = scmp.eq.s32.totalorder %s23, 1
      %p125 = por %p123, %p124
      %p126 = scmp.ne.s32.totalorder %s117, %s118
      %p127 = scmp.eq.s32.totalorder %s23, 0
      %p128 = por %p126, %p127
      %p129 = scmp.ne.s32.totalorder %s117, %s118
      %p130 = scmp.eq.s32.totalorder %s24, 1
      %p131 = por %p129, %p130
      %p133 = scmp.ne.s32.totalorder %s118, %s132
      %p134 = scmp.eq.s32.totalorder %s24, 0
      %p135 = por %p133, %p134
      %s137 = sadd.s32 %s136, 1
      %p140 = scmp.eq.s32.totalorder %s18, 1
      %p141 = scmp.ne.s32.totalorder %s136, %s138
      %p142 = scmp.eq.s32.totalorder %s18, 0
      %p143 = por %p141, %p142
      %p144 = scmp.ne.s32.totalorder %s136, %s138
      %p145 = scmp.eq.s32.totalorder %s23, 1
      %p146 = por %p144, %p145
      %p147 = scmp.ne.s32.totalorder %s138, %s139
      %p148 = scmp.eq.s32.totalorder %s23, 0
      %p149 = por %p147, %p148
      %p150 = scmp.ne.s32.totalorder %s138, %s139
      %p151 = scmp.eq.s32.totalorder %s24, 1
      %p152 = por %p150, %p151
      %p154 = scmp.ne.s32.totalorder %s139, %s153
      %p155 = scmp.eq.s32.totalorder %s24, 0
      %p156 = por %p154, %p155
      %s158 = sadd.s32 %s157, 1
      %p161 = scmp.eq.s32.totalorder %s18, 1
      %p162 = scmp.ne.s32.totalorder %s157, %s159
      %p163 = scmp.eq.s32.totalorder %s18, 0
      %p164 = por %p162, %p163
      %p165 = scmp.ne.s32.totalorder %s157, %s159
      %p166 = scmp.eq.s32.totalorder %s23, 1
      %p167 = por %p165, %p166
      %p168 = scmp.ne.s32.totalorder %s159, %s160
      %p169 = scmp.eq.s32.totalorder %s23, 0
      %p170 = por %p168, %p169
      %p171 = scmp.ne.s32.totalorder %s159, %s160
      %p172 = scmp.eq.s32.totalorder %s24, 1
      %p173 = por %p171, %p172
      %p175 = scmp.ne.s32.totalorder %s160, %s174
      %p176 = scmp.eq.s32.totalorder %s24, 0
      %p177 = por %p175, %p176
      %s178 = ssub.s32 %s18, %s25
      %p179 = scmp.eq.s32.totalorder %s178, 0
      %s181 = sadd.s32 %s180, 1
      %s182 = scalar_select %p179, %s180, %s181
      %p185 = pneg %p179
      %p186 = scmp.eq.s32.totalorder %s18, 1
      %p187 = por %p185, %p186
      %p188 = scmp.ne.s32.totalorder %s180, %s183
      %p189 = scmp.eq.s32.totalorder %s18, 0
      %p190 = por %p188, %p189
      %p191 = scmp.ne.s32.totalorder %s180, %s183
      %p192 = scmp.eq.s32.totalorder %s23, 1
      %p193 = por %p191, %p192
      %p194 = scmp.ne.s32.totalorder %s183, %s184
      %p195 = scmp.eq.s32.totalorder %s23, 0
      %p196 = por %p194, %p195
      %p197 = scmp.ne.s32.totalorder %s183, %s184
      %p198 = scmp.eq.s32.totalorder %s24, 1
      %p199 = por %p197, %p198
      %p201 = scmp.ne.s32.totalorder %s184, %s200
      %p202 = scmp.eq.s32.totalorder %s24, 0
      %p203 = por %p201, %p202
      %p204 = scmp.le.s32.totalorder 1, %s18
      %p205 = scmp.lt.s32.totalorder %s18, 3
      %p206 = pnand %p204, %p205
      %p207 = pneg %p206
      // Predicated region
      $region9: #{tpu_custom_call.1} parent=5 // pred_check
        _
      $region10: #{tpu_custom_call.1} parent=5 // pred_check_branch
        %209 = sbr.rel (%p206) target = $region12
      $region11: #{tpu_custom_call.1} parent=5 // pred_region
        %s210 = ssub.s32 %s18, 1
        // Predicated region
        $region13: #{tpu_custom_call.1} parent=11 // pred_check
          %p211 = pneg %p65
        $region14: #{tpu_custom_call.1} parent=11 // pred_check_branch
          %213 = sbr.rel (%p211) target = $region16
        $region15: #{tpu_custom_call.1} parent=11 // pred_region
          _
        $region16: #{tpu_custom_call.1} parent=11 // pred_fallthru
          _
        // Predicated region
        $region17: #{tpu_custom_call.1} parent=11 // pred_check
          %p214 = pneg %p86
        $region18: #{tpu_custom_call.1} parent=11 // pred_check_branch
          %216 = sbr.rel (%p214) target = $region20
        $region19: #{tpu_custom_call.1} parent=11 // pred_region
          _
        $region20: #{tpu_custom_call.1} parent=11 // pred_fallthru
          _
        // Predicated region
        $region21: #{tpu_custom_call.1} parent=11 // pred_check
          %p217 = pneg %p107
        $region22: #{tpu_custom_call.1} parent=11 // pred_check_branch
          %219 = sbr.rel (%p217) target = $region24
        $region23: #{tpu_custom_call.1} parent=11 // pred_region
          _
        $region24: #{tpu_custom_call.1} parent=11 // pred_fallthru
          _
        // Predicated region
        $region25: #{tpu_custom_call.1} parent=11 // pred_check
          %p220 = pneg %p128
        $region26: #{tpu_custom_call.1} parent=11 // pred_check_branch
          %222 = sbr.rel (%p220) target = $region28
        $region27: #{tpu_custom_call.1} parent=11 // pred_region
          _
        $region28: #{tpu_custom_call.1} parent=11 // pred_fallthru
          _
        // Predicated region
        $region29: #{tpu_custom_call.1} parent=11 // pred_check
          %p223 = pneg %p149
        $region30: #{tpu_custom_call.1} parent=11 // pred_check_branch
          %225 = sbr.rel (%p223) target = $region32
        $region31: #{tpu_custom_call.1} parent=11 // pred_region
          _
        $region32: #{tpu_custom_call.1} parent=11 // pred_fallthru
          _
        // Predicated region
        $region33: #{tpu_custom_call.1} parent=11 // pred_check
          %p226 = pneg %p170
        $region34: #{tpu_custom_call.1} parent=11 // pred_check_branch
          %228 = sbr.rel (%p226) target = $region36
        $region35: #{tpu_custom_call.1} parent=11 // pred_region
          _
        $region36: #{tpu_custom_call.1} parent=11 // pred_fallthru
          _
      $region12: #{tpu_custom_call.1} parent=5 // pred_fallthru
        _
      %p229 = scmp.lt.s32.totalorder %s18, 2
      // Predicated region
      $region37: #{tpu_custom_call.1} parent=5 // pred_check
        %p230 = pneg %p229
      $region38: #{tpu_custom_call.1} parent=5 // pred_check_branch
        %232 = sbr.rel (%p230) target = $region40
      $region39: #{tpu_custom_call.1} parent=5 // pred_region
        // Predicated region
        $region41: #{tpu_custom_call.1} parent=39 // pred_check
          %p233 = pneg %p38
        $region42: #{tpu_custom_call.1} parent=39 // pred_check_branch
          %235 = sbr.rel (%p233) target = $region44
        $region43: #{tpu_custom_call.1} parent=39 // pred_region
          %s236 = smul.u32 32, %s18
          %p237 = scmp.lt.s32.totalorder %s236, 63
          %s238 = scalar_select %p237, %s236, 63
          %s239 = smul.addr %s238, 8
          %s240 = scalar_lea.vmem %s0, %s239
          %s241 = smul.u32 32, %s18
        $region44: #{tpu_custom_call.1} parent=39 // pred_fallthru
          _
      $region40: #{tpu_custom_call.1} parent=5 // pred_fallthru
        _
      %p242 = scmp.le.s32.totalorder 1, %s18
      %p243 = scmp.lt.s32.totalorder %s18, 3
      %p244 = pnand %p242, %p243
      %p245 = pneg %p244
      // Predicated region
      $region45: #{tpu_custom_call.1} parent=5 // pred_check
        _
      $region46: #{tpu_custom_call.1} parent=5 // pred_check_branch
        %247 = sbr.rel (%p244) target = $region48
      $region47: #{tpu_custom_call.1} parent=5 // pred_region
        %s248 = ssub.s32 %s18, 1
        %s249 = smul.u32 32, %s23
        %p250 = scmp.lt.s32.totalorder %s249, 63
        %s251 = scalar_select %p250, %s249, 63
        %s252 = smul.addr %s251, 8
        %s253 = scalar_lea.vmem %s0, %s252
        %p254 = pneg %p44
        %p255 = pneg %p41
        %p256 = pneg %p65
        %p257 = pneg %p62
        %p258 = pneg %p86
        %p259 = pneg %p83
        %p260 = pneg %p107
        %p261 = pneg %p104
        %p262 = pneg %p128
        %p263 = pneg %p125
        %p264 = pneg %p149
        %p265 = pneg %p146
        %p266 = pneg %p170
        %p267 = pneg %p167
        %p268 = pneg %p196
        %p269 = pneg %p193
        %s270 = sand.u32 %s183, 1
        %s271 = scalar_lea.sflag [#allocation4], %s270
        %s272 = sand.u32 %s183, 1
        %s273 = smul.addr %s272, 2
        %s274 = scalar_lea.vmem [#allocation3], %s273
        %s275 = smul.u32 32, %s23
        %p276 = scmp.lt.s32.totalorder %s275, 63
        %s277 = scalar_select %p276, %s275, 63
        %s278 = smul.addr %s277, 8
        %s279 = scalar_lea.vmem %s0, %s278
        %s280 = smul.u32 32, %s23
        %v281 = vld [vmem:[%s279] sm:$0xff]
        %v282 = vld [vmem:[%s279 + $0x8] sm:$0xff]
        %v283 = vld [vmem:[%s279 + $0x10] sm:$0xff]
        %v284 = vld [vmem:[%s279 + $0x18] sm:$0xff]
        %v285 = vld [vmem:[%s279 + $0x20] sm:$0xff]
        %v286 = vld [vmem:[%s279 + $0x28] sm:$0xff]
        %v287 = vld [vmem:[%s279 + $0x30] sm:$0xff]
        %v288 = vld [vmem:[%s279 + $0x38] sm:$0xff]
        %v289 = vld [vmem:[%s279 + $0x40] sm:$0xff]
        %v290 = vld [vmem:[%s279 + $0x48] sm:$0xff]
        %v291 = vld [vmem:[%s279 + $0x50] sm:$0xff]
        %v292 = vld [vmem:[%s279 + $0x58] sm:$0xff]
        %v293 = vld [vmem:[%s279 + $0x60] sm:$0xff]
        %v294 = vld [vmem:[%s279 + $0x68] sm:$0xff]
        %v295 = vld [vmem:[%s279 + $0x70] sm:$0xff]
        %v296 = vld [vmem:[%s279 + $0x78] sm:$0xff]
        %v297 = vld [vmem:[%s279 + $0x80] sm:$0xff]
        %v298 = vld [vmem:[%s279 + $0x88] sm:$0xff]
        %v299 = vld [vmem:[%s279 + $0x90] sm:$0xff]
        %v300 = vld [vmem:[%s279 + $0x98] sm:$0xff]
        %v301 = vld [vmem:[%s279 + $0xa0] sm:$0xff]
        %v302 = vld [vmem:[%s279 + $0xa8] sm:$0xff]
        %v303 = vld [vmem:[%s279 + $0xb0] sm:$0xff]
        %v304 = vld [vmem:[%s279 + $0xb8] sm:$0xff]
        %v305 = vld [vmem:[%s279 + $0xc0] sm:$0xff]
        %v306 = vld [vmem:[%s279 + $0xc8] sm:$0xff]
        %v307 = vld [vmem:[%s279 + $0xd0] sm:$0xff]
        %v308 = vld [vmem:[%s279 + $0xd8] sm:$0xff]
        %v309 = vld [vmem:[%s279 + $0xe0] sm:$0xff]
        %v310 = vld [vmem:[%s279 + $0xe8] sm:$0xff]
        %v311 = vld [vmem:[%s279 + $0xf0] sm:$0xff]
        %v312 = vld [vmem:[%s279 + $0xf8] sm:$0xff]
        %v313 = vld [vmem:[%s1] sm:$0xff]
        %v314 = vld [vmem:[%s1 + $0x8] sm:$0xff]
        %v315 = vld [vmem:[%s1 + $0x10] sm:$0xff]
        %v316 = vld [vmem:[%s1 + $0x18] sm:$0xff]
        %v317 = vld [vmem:[%s2] sm:$0x1]
        %v319 = vperm.slane %v317, 0
        %vm321 = vcmask 261120
        %v323 = vsel %vm321, %v281, 0
        %v326 = vsel %vm321, %v282, 0
        %v329 = vsel %vm321, %v283, 0
        %v332 = vsel %vm321, %v284, 0
        %v335 = vsel %vm321, %v285, 0
        %v338 = vsel %vm321, %v286, 0
        %v341 = vsel %vm321, %v287, 0
        %v344 = vsel %vm321, %v288, 0
        %v347 = vsel %vm321, %v289, 0
        %v350 = vsel %vm321, %v290, 0
        %v353 = vsel %vm321, %v291, 0
        %v356 = vsel %vm321, %v292, 0
        %v359 = vsel %vm321, %v293, 0
        %v362 = vsel %vm321, %v294, 0
        %v365 = vsel %vm321, %v295, 0
        %v368 = vsel %vm321, %v296, 0
        %v371 = vsel %vm321, %v297, 0
        %v374 = vsel %vm321, %v298, 0
        %v377 = vsel %vm321, %v299, 0
        %v380 = vsel %vm321, %v300, 0
        %v383 = vsel %vm321, %v301, 0
        %v386 = vsel %vm321, %v302, 0
        %v389 = vsel %vm321, %v303, 0
        %v392 = vsel %vm321, %v304, 0
        %v395 = vsel %vm321, %v305, 0
        %v398 = vsel %vm321, %v306, 0
        %v401 = vsel %vm321, %v307, 0
        %v404 = vsel %vm321, %v308, 0
        %v407 = vsel %vm321, %v309, 0
        %v410 = vsel %vm321, %v310, 0
        %v413 = vsel %vm321, %v311, 0
        %v416 = vsel %vm321, %v312, 0
        %418 = vmatpush.msra.mxu0 0.0
        %419 = vmatpush.msra.mxu0 0.0
        %420 = vmatpush.msra.mxu0 0.0
        %421 = vmatpush.msra.mxu0 0.0
        %422 = vmatpush.msra.mxu0 0.0
        %423 = vmatpush.msra.mxu0 0.0
        %424 = vmatpush.msra.mxu0 0.0
        %425 = vmatpush.msra.mxu0 0.0
        %426 = vmatpush.msra.mxu0 0.0
        %427 = vmatpush.msra.mxu0 0.0
        %428 = vmatpush.msra.mxu0 0.0
        %429 = vmatpush.msra.mxu0 0.0
        %430 = vmatpush.msra.mxu0 %v316
        %431 = vmatpush.msra.mxu0 %v315
        %432 = vmatpush.msra.mxu0 %v314
        %433 = vmatpush.msra.mxu0 %v313
        %434 = vmatmul.f32.gmra.mxu0 %v323
        %v435 = vpop.f32.mrf.mxu0
        %v436 = vadd.f32 %v319, %v435
        %437 = vmatmul.f32.gmra.mxu0 %v326
        %v438 = vpop.f32.mrf.mxu0
        %v439 = vadd.f32 %v319, %v438
        %440 = vmatmul.f32.gmra.mxu0 %v329
        %v441 = vpop.f32.mrf.mxu0
        %v442 = vadd.f32 %v319, %v441
        %443 = vmatmul.f32.gmra.mxu0 %v332
        %v444 = vpop.f32.mrf.mxu0
        %v445 = vadd.f32 %v319, %v444
        %446 = vmatmul.f32.gmra.mxu0 %v335
        %v447 = vpop.f32.mrf.mxu0
        %v448 = vadd.f32 %v319, %v447
        %449 = vmatmul.f32.gmra.mxu0 %v338
        %v450 = vpop.f32.mrf.mxu0
        %v451 = vadd.f32 %v319, %v450
        %452 = vmatmul.f32.gmra.mxu0 %v341
        %v453 = vpop.f32.mrf.mxu0
        %v454 = vadd.f32 %v319, %v453
        %455 = vmatmul.f32.gmra.mxu0 %v344
        %v456 = vpop.f32.mrf.mxu0
        %v457 = vadd.f32 %v319, %v456
        %458 = vmatmul.f32.gmra.mxu0 %v347
        %v459 = vpop.f32.mrf.mxu0
        %v460 = vadd.f32 %v319, %v459
        %461 = vmatmul.f32.gmra.mxu0 %v350
        %v462 = vpop.f32.mrf.mxu0
        %v463 = vadd.f32 %v319, %v462
        %464 = vmatmul.f32.gmra.mxu0 %v353
        %v465 = vpop.f32.mrf.mxu0
        %v466 = vadd.f32 %v319, %v465
        %467 = vmatmul.f32.gmra.mxu0 %v356
        %v468 = vpop.f32.mrf.mxu0
        %v469 = vadd.f32 %v319, %v468
        %470 = vmatmul.f32.gmra.mxu0 %v359
        %v471 = vpop.f32.mrf.mxu0
        %v472 = vadd.f32 %v319, %v471
        %473 = vmatmul.f32.gmra.mxu0 %v362
        %v474 = vpop.f32.mrf.mxu0
        %v475 = vadd.f32 %v319, %v474
        %476 = vmatmul.f32.gmra.mxu0 %v365
        %v477 = vpop.f32.mrf.mxu0
        %v478 = vadd.f32 %v319, %v477
        %479 = vmatmul.f32.gmra.mxu0 %v368
        %v480 = vpop.f32.mrf.mxu0
        %v481 = vadd.f32 %v319, %v480
        %482 = vmatmul.f32.gmra.mxu0 %v371
        %v483 = vpop.f32.mrf.mxu0
        %v484 = vadd.f32 %v319, %v483
        %485 = vmatmul.f32.gmra.mxu0 %v374
        %v486 = vpop.f32.mrf.mxu0
        %v487 = vadd.f32 %v319, %v486
        %488 = vmatmul.f32.gmra.mxu0 %v377
        %v489 = vpop.f32.mrf.mxu0
        %v490 = vadd.f32 %v319, %v489
        %491 = vmatmul.f32.gmra.mxu0 %v380
        %v492 = vpop.f32.mrf.mxu0
        %v493 = vadd.f32 %v319, %v492
        %494 = vmatmul.f32.gmra.mxu0 %v383
        %v495 = vpop.f32.mrf.mxu0
        %v496 = vadd.f32 %v319, %v495
        %497 = vmatmul.f32.gmra.mxu0 %v386
        %v498 = vpop.f32.mrf.mxu0
        %v499 = vadd.f32 %v319, %v498
        %500 = vmatmul.f32.gmra.mxu0 %v389
        %v501 = vpop.f32.mrf.mxu0
        %v502 = vadd.f32 %v319, %v501
        %503 = vmatmul.f32.gmra.mxu0 %v392
        %v504 = vpop.f32.mrf.mxu0
        %v505 = vadd.f32 %v319, %v504
        %506 = vmatmul.f32.gmra.mxu0 %v395
        %v507 = vpop.f32.mrf.mxu0
        %v508 = vadd.f32 %v319, %v507
        %509 = vmatmul.f32.gmra.mxu0 %v398
        %v510 = vpop.f32.mrf.mxu0
        %v511 = vadd.f32 %v319, %v510
        %512 = vmatmul.f32.gmra.mxu0 %v401
        %v513 = vpop.f32.mrf.mxu0
        %v514 = vadd.f32 %v319, %v513
        %515 = vmatmul.f32.gmra.mxu0 %v404
        %v516 = vpop.f32.mrf.mxu0
        %v517 = vadd.f32 %v319, %v516
        %518 = vmatmul.f32.gmra.mxu0 %v407
        %v519 = vpop.f32.mrf.mxu0
        %v520 = vadd.f32 %v319, %v519
        %521 = vmatmul.f32.gmra.mxu0 %v410
        %v522 = vpop.f32.mrf.mxu0
        %v523 = vadd.f32 %v319, %v522
        %524 = vmatmul.f32.gmra.mxu0 %v413
        %v525 = vpop.f32.mrf.mxu0
        %v526 = vadd.f32 %v319, %v525
        %527 = vmatmul.f32.gmra.mxu0 %v416
        %v528 = vpop.f32.mrf.mxu0
        %v529 = vadd.f32 %v319, %v528
        %530 = vdwg.mxu0
        %v531 = vmax.f32 %v436, 0.0
        %v532 = vmax.f32 %v439, 0.0
        %v533 = vmax.f32 %v442, 0.0
        %v534 = vmax.f32 %v445, 0.0
        %v535 = vmax.f32 %v448, 0.0
        %v536 = vmax.f32 %v451, 0.0
        %v537 = vmax.f32 %v454, 0.0
        %v538 = vmax.f32 %v457, 0.0
        %v539 = vmax.f32 %v460, 0.0
        %v540 = vmax.f32 %v463, 0.0
        %v541 = vmax.f32 %v466, 0.0
        %v542 = vmax.f32 %v469, 0.0
        %v543 = vmax.f32 %v472, 0.0
        %v544 = vmax.f32 %v475, 0.0
        %v545 = vmax.f32 %v478, 0.0
        %v546 = vmax.f32 %v481, 0.0
        %v547 = vmax.f32 %v484, 0.0
        %v548 = vmax.f32 %v487, 0.0
        %v549 = vmax.f32 %v490, 0.0
        %v550 = vmax.f32 %v493, 0.0
        %v551 = vmax.f32 %v496, 0.0
        %v552 = vmax.f32 %v499, 0.0
        %v553 = vmax.f32 %v502, 0.0
        %v554 = vmax.f32 %v505, 0.0
        %v555 = vmax.f32 %v508, 0.0
        %v556 = vmax.f32 %v511, 0.0
        %v557 = vmax.f32 %v514, 0.0
        %v558 = vmax.f32 %v517, 0.0
        %v559 = vmax.f32 %v520, 0.0
        %v560 = vmax.f32 %v523, 0.0
        %v561 = vmax.f32 %v526, 0.0
        %v562 = vmax.f32 %v529, 0.0
        %v563 = vld [vmem:[%s3] sm:$0xff]
        %v564 = vld [vmem:[%s3 + $0x8] sm:$0xff]
        %v565 = vld [vmem:[%s3 + $0x10] sm:$0xff]
        %v566 = vld [vmem:[%s3 + $0x18] sm:$0xff]
        %v567 = vld [vmem:[%s3 + $0x20] sm:$0xff]
        %v568 = vld [vmem:[%s3 + $0x28] sm:$0xff]
        %v569 = vld [vmem:[%s3 + $0x30] sm:$0xff]
        %v570 = vld [vmem:[%s3 + $0x38] sm:$0xff]
        %v571 = vld [vmem:[%s4] sm:$0x1]
        %v573 = vperm.slane %v571, 0
        %vm575 = vcmask 523264
        %v577 = vsel %vm575, %v531, 0
        %v580 = vsel %vm575, %v532, 0
        %v583 = vsel %vm575, %v533, 0
        %v586 = vsel %vm575, %v534, 0
        %v589 = vsel %vm575, %v535, 0
        %v592 = vsel %vm575, %v536, 0
        %v595 = vsel %vm575, %v537, 0
        %v598 = vsel %vm575, %v538, 0
        %v601 = vsel %vm575, %v539, 0
        %v604 = vsel %vm575, %v540, 0
        %v607 = vsel %vm575, %v541, 0
        %v610 = vsel %vm575, %v542, 0
        %v613 = vsel %vm575, %v543, 0
        %v616 = vsel %vm575, %v544, 0
        %v619 = vsel %vm575, %v545, 0
        %v622 = vsel %vm575, %v546, 0
        %v625 = vsel %vm575, %v547, 0
        %v628 = vsel %vm575, %v548, 0
        %v631 = vsel %vm575, %v549, 0
        %v634 = vsel %vm575, %v550, 0
        %v637 = vsel %vm575, %v551, 0
        %v640 = vsel %vm575, %v552, 0
        %v643 = vsel %vm575, %v553, 0
        %v646 = vsel %vm575, %v554, 0
        %v649 = vsel %vm575, %v555, 0
        %v652 = vsel %vm575, %v556, 0
        %v655 = vsel %vm575, %v557, 0
        %v658 = vsel %vm575, %v558, 0
        %v661 = vsel %vm575, %v559, 0
        %v664 = vsel %vm575, %v560, 0
        %v667 = vsel %vm575, %v561, 0
        %v670 = vsel %vm575, %v562, 0
        %672 = vmatpush.msra.mxu0 0.0
        %673 = vmatpush.msra.mxu0 0.0
        %674 = vmatpush.msra.mxu0 0.0
        %675 = vmatpush.msra.mxu0 0.0
        %676 = vmatpush.msra.mxu0 0.0
        %677 = vmatpush.msra.mxu0 0.0
        %678 = vmatpush.msra.mxu0 0.0
        %679 = vmatpush.msra.mxu0 0.0
        %680 = vmatpush.msra.mxu0 %v570
        %681 = vmatpush.msra.mxu0 %v569
        %682 = vmatpush.msra.mxu0 %v568
        %683 = vmatpush.msra.mxu0 %v567
        %684 = vmatpush.msra.mxu0 %v566
        %685 = vmatpush.msra.mxu0 %v565
        %686 = vmatpush.msra.mxu0 %v564
        %687 = vmatpush.msra.mxu0 %v563
        %688 = vmatmul.f32.gmra.mxu0 %v577
        %v689 = vpop.f32.mrf.mxu0
        %v690 = vadd.f32 %v573, %v689
        %691 = vmatmul.f32.gmra.mxu0 %v580
        %v692 = vpop.f32.mrf.mxu0
        %v693 = vadd.f32 %v573, %v692
        %694 = vmatmul.f32.gmra.mxu0 %v583
        %v695 = vpop.f32.mrf.mxu0
        %v696 = vadd.f32 %v573, %v695
        %697 = vmatmul.f32.gmra.mxu0 %v586
        %v698 = vpop.f32.mrf.mxu0
        %v699 = vadd.f32 %v573, %v698
        %700 = vmatmul.f32.gmra.mxu0 %v589
        %v701 = vpop.f32.mrf.mxu0
        %v702 = vadd.f32 %v573, %v701
        %703 = vmatmul.f32.gmra.mxu0 %v592
        %v704 = vpop.f32.mrf.mxu0
        %v705 = vadd.f32 %v573, %v704
        %706 = vmatmul.f32.gmra.mxu0 %v595
        %v707 = vpop.f32.mrf.mxu0
        %v708 = vadd.f32 %v573, %v707
        %709 = vmatmul.f32.gmra.mxu0 %v598
        %v710 = vpop.f32.mrf.mxu0
        %v711 = vadd.f32 %v573, %v710
        %712 = vmatmul.f32.gmra.mxu0 %v601
        %v713 = vpop.f32.mrf.mxu0
        %v714 = vadd.f32 %v573, %v713
        %715 = vmatmul.f32.gmra.mxu0 %v604
        %v716 = vpop.f32.mrf.mxu0
        %v717 = vadd.f32 %v573, %v716
        %718 = vmatmul.f32.gmra.mxu0 %v607
        %v719 = vpop.f32.mrf.mxu0
        %v720 = vadd.f32 %v573, %v719
        %721 = vmatmul.f32.gmra.mxu0 %v610
        %v722 = vpop.f32.mrf.mxu0
        %v723 = vadd.f32 %v573, %v722
        %724 = vmatmul.f32.gmra.mxu0 %v613
        %v725 = vpop.f32.mrf.mxu0
        %v726 = vadd.f32 %v573, %v725
        %727 = vmatmul.f32.gmra.mxu0 %v616
        %v728 = vpop.f32.mrf.mxu0
        %v729 = vadd.f32 %v573, %v728
        %730 = vmatmul.f32.gmra.mxu0 %v619
        %v731 = vpop.f32.mrf.mxu0
        %v732 = vadd.f32 %v573, %v731
        %733 = vmatmul.f32.gmra.mxu0 %v622
        %v734 = vpop.f32.mrf.mxu0
        %v735 = vadd.f32 %v573, %v734
        %736 = vmatmul.f32.gmra.mxu0 %v625
        %v737 = vpop.f32.mrf.mxu0
        %v738 = vadd.f32 %v573, %v737
        %739 = vmatmul.f32.gmra.mxu0 %v628
        %v740 = vpop.f32.mrf.mxu0
        %v741 = vadd.f32 %v573, %v740
        %742 = vmatmul.f32.gmra.mxu0 %v631
        %v743 = vpop.f32.mrf.mxu0
        %v744 = vadd.f32 %v573, %v743
        %745 = vmatmul.f32.gmra.mxu0 %v634
        %v746 = vpop.f32.mrf.mxu0
        %v747 = vadd.f32 %v573, %v746
        %748 = vmatmul.f32.gmra.mxu0 %v637
        %v749 = vpop.f32.mrf.mxu0
        %v750 = vadd.f32 %v573, %v749
        %751 = vmatmul.f32.gmra.mxu0 %v640
        %v752 = vpop.f32.mrf.mxu0
        %v753 = vadd.f32 %v573, %v752
        %754 = vmatmul.f32.gmra.mxu0 %v643
        %v755 = vpop.f32.mrf.mxu0
        %v756 = vadd.f32 %v573, %v755
        %757 = vmatmul.f32.gmra.mxu0 %v646
        %v758 = vpop.f32.mrf.mxu0
        %v759 = vadd.f32 %v573, %v758
        %760 = vmatmul.f32.gmra.mxu0 %v649
        %v761 = vpop.f32.mrf.mxu0
        %v762 = vadd.f32 %v573, %v761
        %763 = vmatmul.f32.gmra.mxu0 %v652
        %v764 = vpop.f32.mrf.mxu0
        %v765 = vadd.f32 %v573, %v764
        %766 = vmatmul.f32.gmra.mxu0 %v655
        %v767 = vpop.f32.mrf.mxu0
        %v768 = vadd.f32 %v573, %v767
        %769 = vmatmul.f32.gmra.mxu0 %v658
        %v770 = vpop.f32.mrf.mxu0
        %v771 = vadd.f32 %v573, %v770
        %772 = vmatmul.f32.gmra.mxu0 %v661
        %v773 = vpop.f32.mrf.mxu0
        %v774 = vadd.f32 %v573, %v773
        %775 = vmatmul.f32.gmra.mxu0 %v664
        %v776 = vpop.f32.mrf.mxu0
        %v777 = vadd.f32 %v573, %v776
        %778 = vmatmul.f32.gmra.mxu0 %v667
        %v779 = vpop.f32.mrf.mxu0
        %v780 = vadd.f32 %v573, %v779
        %781 = vmatmul.f32.gmra.mxu0 %v670
        %v782 = vpop.f32.mrf.mxu0
        %v783 = vadd.f32 %v573, %v782
        %784 = vdwg.mxu0
        %v785 = vmax.f32 %v690, 0.0
        %v786 = vmax.f32 %v693, 0.0
        %v787 = vmax.f32 %v696, 0.0
        %v788 = vmax.f32 %v699, 0.0
        %v789 = vmax.f32 %v702, 0.0
        %v790 = vmax.f32 %v705, 0.0
        %v791 = vmax.f32 %v708, 0.0
        %v792 = vmax.f32 %v711, 0.0
        %v793 = vmax.f32 %v714, 0.0
        %v794 = vmax.f32 %v717, 0.0
        %v795 = vmax.f32 %v720, 0.0
        %v796 = vmax.f32 %v723, 0.0
        %v797 = vmax.f32 %v726, 0.0
        %v798 = vmax.f32 %v729, 0.0
        %v799 = vmax.f32 %v732, 0.0
        %v800 = vmax.f32 %v735, 0.0
        %v801 = vmax.f32 %v738, 0.0
        %v802 = vmax.f32 %v741, 0.0
        %v803 = vmax.f32 %v744, 0.0
        %v804 = vmax.f32 %v747, 0.0
        %v805 = vmax.f32 %v750, 0.0
        %v806 = vmax.f32 %v753, 0.0
        %v807 = vmax.f32 %v756, 0.0
        %v808 = vmax.f32 %v759, 0.0
        %v809 = vmax.f32 %v762, 0.0
        %v810 = vmax.f32 %v765, 0.0
        %v811 = vmax.f32 %v768, 0.0
        %v812 = vmax.f32 %v771, 0.0
        %v813 = vmax.f32 %v774, 0.0
        %v814 = vmax.f32 %v777, 0.0
        %v815 = vmax.f32 %v780, 0.0
        %v816 = vmax.f32 %v783, 0.0
        %v817 = vld [vmem:[%s5] sm:$0x1]
        %v818 = vld [vmem:[#allocation2] sm:$0x1]
        %v820 = vperm.slane %v817, 0
        %v822 = vmul.f32 %v785, %v820
        %v823 = vmul.f32 %v786, %v820
        %v824 = vmul.f32 %v787, %v820
        %v825 = vmul.f32 %v788, %v820
        %v826 = vmul.f32 %v789, %v820
        %v827 = vmul.f32 %v790, %v820
        %v828 = vmul.f32 %v791, %v820
        %v829 = vmul.f32 %v792, %v820
        %v830 = vmul.f32 %v793, %v820
        %v831 = vmul.f32 %v794, %v820
        %v832 = vmul.f32 %v795, %v820
        %v833 = vmul.f32 %v796, %v820
        %v834 = vmul.f32 %v797, %v820
        %v835 = vmul.f32 %v798, %v820
        %v836 = vmul.f32 %v799, %v820
        %v837 = vmul.f32 %v800, %v820
        %v838 = vmul.f32 %v801, %v820
        %v839 = vmul.f32 %v802, %v820
        %v840 = vmul.f32 %v803, %v820
        %v841 = vmul.f32 %v804, %v820
        %v842 = vmul.f32 %v805, %v820
        %v843 = vmul.f32 %v806, %v820
        %v844 = vmul.f32 %v807, %v820
        %v845 = vmul.f32 %v808, %v820
        %v846 = vmul.f32 %v809, %v820
        %v847 = vmul.f32 %v810, %v820
        %v848 = vmul.f32 %v811, %v820
        %v849 = vmul.f32 %v812, %v820
        %v850 = vmul.f32 %v813, %v820
        %v851 = vmul.f32 %v814, %v820
        %v852 = vmul.f32 %v815, %v820
        %v853 = vmul.f32 %v816, %v820
        %v854 = vsel %vm321, %v822, 0.0
        %855 = vadd.xlane.f32.xlu0 %v854
        %v856 = vpop.xlane.xlu0 %855
        %v857 = vsel %vm321, %v823, 0.0
        %858 = vadd.xlane.f32.xlu0 %v857
        %v859 = vpop.xlane.xlu0 %858
        %v860 = vsel %vm321, %v824, 0.0
        %861 = vadd.xlane.f32.xlu0 %v860
        %v862 = vpop.xlane.xlu0 %861
        %v863 = vsel %vm321, %v825, 0.0
        %864 = vadd.xlane.f32.xlu0 %v863
        %v865 = vpop.xlane.xlu0 %864
        %v866 = vsel %vm321, %v826, 0.0
        %867 = vadd.xlane.f32.xlu0 %v866
        %v868 = vpop.xlane.xlu0 %867
        %v869 = vsel %vm321, %v827, 0.0
        %870 = vadd.xlane.f32.xlu0 %v869
        %v871 = vpop.xlane.xlu0 %870
        %v872 = vsel %vm321, %v828, 0.0
        %873 = vadd.xlane.f32.xlu0 %v872
        %v874 = vpop.xlane.xlu0 %873
        %v875 = vsel %vm321, %v829, 0.0
        %876 = vadd.xlane.f32.xlu0 %v875
        %v877 = vpop.xlane.xlu0 %876
        %v878 = vsel %vm321, %v830, 0.0
        %879 = vadd.xlane.f32.xlu0 %v878
        %v880 = vpop.xlane.xlu0 %879
        %v881 = vsel %vm321, %v831, 0.0
        %882 = vadd.xlane.f32.xlu0 %v881
        %v883 = vpop.xlane.xlu0 %882
        %v884 = vsel %vm321, %v832, 0.0
        %885 = vadd.xlane.f32.xlu0 %v884
        %v886 = vpop.xlane.xlu0 %885
        %v887 = vsel %vm321, %v833, 0.0
        %888 = vadd.xlane.f32.xlu0 %v887
        %v889 = vpop.xlane.xlu0 %888
        %v890 = vsel %vm321, %v834, 0.0
        %891 = vadd.xlane.f32.xlu0 %v890
        %v892 = vpop.xlane.xlu0 %891
        %v893 = vsel %vm321, %v835, 0.0
        %894 = vadd.xlane.f32.xlu0 %v893
        %v895 = vpop.xlane.xlu0 %894
        %v896 = vsel %vm321, %v836, 0.0
        %897 = vadd.xlane.f32.xlu0 %v896
        %v898 = vpop.xlane.xlu0 %897
        %v899 = vsel %vm321, %v837, 0.0
        %900 = vadd.xlane.f32.xlu0 %v899
        %v901 = vpop.xlane.xlu0 %900
        %v902 = vsel %vm321, %v838, 0.0
        %903 = vadd.xlane.f32.xlu0 %v902
        %v904 = vpop.xlane.xlu0 %903
        %v905 = vsel %vm321, %v839, 0.0
        %906 = vadd.xlane.f32.xlu0 %v905
        %v907 = vpop.xlane.xlu0 %906
        %v908 = vsel %vm321, %v840, 0.0
        %909 = vadd.xlane.f32.xlu0 %v908
        %v910 = vpop.xlane.xlu0 %909
        %v911 = vsel %vm321, %v841, 0.0
        %912 = vadd.xlane.f32.xlu0 %v911
        %v913 = vpop.xlane.xlu0 %912
        %v914 = vsel %vm321, %v842, 0.0
        %915 = vadd.xlane.f32.xlu0 %v914
        %v916 = vpop.xlane.xlu0 %915
        %v917 = vsel %vm321, %v843, 0.0
        %918 = vadd.xlane.f32.xlu0 %v917
        %v919 = vpop.xlane.xlu0 %918
        %v920 = vsel %vm321, %v844, 0.0
        %921 = vadd.xlane.f32.xlu0 %v920
        %v922 = vpop.xlane.xlu0 %921
        %v923 = vsel %vm321, %v845, 0.0
        %924 = vadd.xlane.f32.xlu0 %v923
        %v925 = vpop.xlane.xlu0 %924
        %v926 = vsel %vm321, %v846, 0.0
        %927 = vadd.xlane.f32.xlu0 %v926
        %v928 = vpop.xlane.xlu0 %927
        %v929 = vsel %vm321, %v847, 0.0
        %930 = vadd.xlane.f32.xlu0 %v929
        %v931 = vpop.xlane.xlu0 %930
        %v932 = vsel %vm321, %v848, 0.0
        %933 = vadd.xlane.f32.xlu0 %v932
        %v934 = vpop.xlane.xlu0 %933
        %v935 = vsel %vm321, %v849, 0.0
        %936 = vadd.xlane.f32.xlu0 %v935
        %v937 = vpop.xlane.xlu0 %936
        %v938 = vsel %vm321, %v850, 0.0
        %939 = vadd.xlane.f32.xlu0 %v938
        %v940 = vpop.xlane.xlu0 %939
        %v941 = vsel %vm321, %v851, 0.0
        %942 = vadd.xlane.f32.xlu0 %v941
        %v943 = vpop.xlane.xlu0 %942
        %v944 = vsel %vm321, %v852, 0.0
        %945 = vadd.xlane.f32.xlu0 %v944
        %v946 = vpop.xlane.xlu0 %945
        %v947 = vsel %vm321, %v853, 0.0
        %948 = vadd.xlane.f32.xlu0 %v947
        %v949 = vpop.xlane.xlu0 %948
        %v951 = vperm.slane %v818, 0
        %v953 = vadd.f32 %v856, %v951
        %v954 = vadd.f32 %v859, %v951
        %v955 = vadd.f32 %v862, %v951
        %v956 = vadd.f32 %v865, %v951
        %v957 = vadd.f32 %v868, %v951
        %v958 = vadd.f32 %v871, %v951
        %v959 = vadd.f32 %v874, %v951
        %v960 = vadd.f32 %v877, %v951
        %v961 = vadd.f32 %v880, %v951
        %v962 = vadd.f32 %v883, %v951
        %v963 = vadd.f32 %v886, %v951
        %v964 = vadd.f32 %v889, %v951
        %v965 = vadd.f32 %v892, %v951
        %v966 = vadd.f32 %v895, %v951
        %v967 = vadd.f32 %v898, %v951
        %v968 = vadd.f32 %v901, %v951
        %v969 = vadd.f32 %v904, %v951
        %v970 = vadd.f32 %v907, %v951
        %v971 = vadd.f32 %v910, %v951
        %v972 = vadd.f32 %v913, %v951
        %v973 = vadd.f32 %v916, %v951
        %v974 = vadd.f32 %v919, %v951
        %v975 = vadd.f32 %v922, %v951
        %v976 = vadd.f32 %v925, %v951
        %v977 = vadd.f32 %v928, %v951
        %v978 = vadd.f32 %v931, %v951
        %v979 = vadd.f32 %v934, %v951
        %v980 = vadd.f32 %v937, %v951
        %v981 = vadd.f32 %v940, %v951
        %v982 = vadd.f32 %v943, %v951
        %v983 = vadd.f32 %v946, %v951
        %v984 = vadd.f32 %v949, %v951
        %985 = vxpose.xlu0.b32.start [1/16] %v953, 128
        %986 = vxpose.xlu0.b32.cont [2/16] %v954, 128
        %987 = vxpose.xlu0.b32.cont [3/16] %v955, 128
        %988 = vxpose.xlu0.b32.cont [4/16] %v956, 128
        %989 = vxpose.xlu0.b32.cont [5/16] %v957, 128
        %990 = vxpose.xlu0.b32.cont [6/16] %v958, 128
        %991 = vxpose.xlu0.b32.cont [7/16] %v959, 128
        %992 = vxpose.xlu0.b32.cont [8/16] %v960, 128
        %993 = vxpose.xlu0.b32.cont [9/16] %v961, 128
        %994 = vxpose.xlu0.b32.cont [10/16] %v962, 128
        %995 = vxpose.xlu0.b32.cont [11/16] %v963, 128
        %996 = vxpose.xlu0.b32.cont [12/16] %v964, 128
        %997 = vxpose.xlu0.b32.cont [13/16] %v965, 128
        %998 = vxpose.xlu0.b32.cont [14/16] %v966, 128
        %999 = vxpose.xlu0.b32.cont [15/16] %v967, 128
        %1000 = vxpose.xlu0.b32.end [16/16] %v968, 128
        %v1001 = vpop.trf.xlu0
        %v1002 = vpop.trf.xlu0
        %v1003 = vpop.trf.xlu0
        %v1004 = vpop.trf.xlu0
        %v1005 = vpop.trf.xlu0
        %v1006 = vpop.trf.xlu0
        %v1007 = vpop.trf.xlu0
        %v1008 = vpop.trf.xlu0
        %v1009 = vpop.trf.xlu0
        %v1010 = vpop.trf.xlu0
        %v1011 = vpop.trf.xlu0
        %v1012 = vpop.trf.xlu0
        %v1013 = vpop.trf.xlu0
        %v1014 = vpop.trf.xlu0
        %v1015 = vpop.trf.xlu0
        %v1016 = vpop.trf.xlu0
        %1017 = vxpose.xlu0.b32.start [1/16] %v969, 128
        %1018 = vxpose.xlu0.b32.cont [2/16] %v970, 128
        %1019 = vxpose.xlu0.b32.cont [3/16] %v971, 128
        %1020 = vxpose.xlu0.b32.cont [4/16] %v972, 128
        %1021 = vxpose.xlu0.b32.cont [5/16] %v973, 128
        %1022 = vxpose.xlu0.b32.cont [6/16] %v974, 128
        %1023 = vxpose.xlu0.b32.cont [7/16] %v975, 128
        %1024 = vxpose.xlu0.b32.cont [8/16] %v976, 128
        %1025 = vxpose.xlu0.b32.cont [9/16] %v977, 128
        %1026 = vxpose.xlu0.b32.cont [10/16] %v978, 128
        %1027 = vxpose.xlu0.b32.cont [11/16] %v979, 128
        %1028 = vxpose.xlu0.b32.cont [12/16] %v980, 128
        %1029 = vxpose.xlu0.b32.cont [13/16] %v981, 128
        %1030 = vxpose.xlu0.b32.cont [14/16] %v982, 128
        %1031 = vxpose.xlu0.b32.cont [15/16] %v983, 128
        %1032 = vxpose.xlu0.b32.end [16/16] %v984, 128
        %v1033 = vpop.trf.xlu0
        %v1034 = vpop.trf.xlu0
        %v1035 = vpop.trf.xlu0
        %v1036 = vpop.trf.xlu0
        %v1037 = vpop.trf.xlu0
        %v1038 = vpop.trf.xlu0
        %v1039 = vpop.trf.xlu0
        %v1040 = vpop.trf.xlu0
        %v1041 = vpop.trf.xlu0
        %v1042 = vpop.trf.xlu0
        %v1043 = vpop.trf.xlu0
        %v1044 = vpop.trf.xlu0
        %v1045 = vpop.trf.xlu0
        %v1046 = vpop.trf.xlu0
        %v1047 = vpop.trf.xlu0
        %v1048 = vpop.trf.xlu0
        %v1051 = vrot.slane %v1033, 7
        %vm1052 = vcmask 1040384
        %v1053 = vsel %vm1052, %v1001, %v1051
        %v1055 = vlaneseq
        %vm1056 = vcmp.ge.s32.totalorder %v1055, 0
        %vm1057 = vcmp.lt.s32.totalorder %v1055, 256
        %vm1058 = vmand %vm1056, %vm1057
        %1059 = vst.msk [vmem:[%s274] sm:$0x3] %vm1058, %v1053
        %s1060 = sand.u32 %s183, 1
        %s1061 = scalar_lea.sflag [#allocation4], %s1060
        %s1062 = sand.u32 %s183, 1
        %s1063 = smul.addr %s1062, 2
        %s1064 = scalar_lea.vmem [#allocation3], %s1063
        // Predicated region
        $region49: #{tpu_custom_call.1} parent=47 // pred_check
          %p1065 = pneg %p193
        $region50: #{tpu_custom_call.1} parent=47 // pred_check_branch
          %1067 = sbr.rel (%p1065) target = $region52
        $region51: #{tpu_custom_call.1} parent=47 // pred_region
          %1069 = vsyncadd %s1061, 0
          %s1070 = smul.addr %s23, 2
          %s1071 = scalar_lea.hbm %s7, %s1070
          %s1073 = sshll.u32 %s1064, 4
          %s1074 = int_to_ptr.vmem [resolvable:$true] %s1073
          %s1075 = sshll.u32 %s1071, 4
          %s1076 = int_to_ptr.hbm [resolvable:$true] %s1075
          %1078 = dma.vmem_to_hbm [thread:$0]  %s1074, 32, %s1076, %s1061
        $region52: #{tpu_custom_call.1} parent=47 // pred_fallthru
          _
      $region48: #{tpu_custom_call.1} parent=5 // pred_fallthru
        _
      %p1079 = scmp.le.s32.totalorder 2, %s18
      // Predicated region
      $region53: #{tpu_custom_call.1} parent=5 // pred_check
        %p1080 = pneg %p1079
      $region54: #{tpu_custom_call.1} parent=5 // pred_check_branch
        %1082 = sbr.rel (%p1080) target = $region56
      $region55: #{tpu_custom_call.1} parent=5 // pred_region
        %s1083 = ssub.s32 %s18, 2
        // Predicated region
        $region57: #{tpu_custom_call.1} parent=55 // pred_check
          %p1084 = pneg %p199
        $region58: #{tpu_custom_call.1} parent=55 // pred_check_branch
          %1086 = sbr.rel (%p1084) target = $region60
        $region59: #{tpu_custom_call.1} parent=55 // pred_region
          %s1087 = sand.u32 %s184, 1
          %s1088 = scalar_lea.sflag [#allocation4], %s1087
          %s1089 = sand.u32 %s184, 1
          %s1090 = smul.addr %s1089, 2
          %s1091 = scalar_lea.vmem [#allocation3], %s1090
          %1093 = dma.done %s1088, 32
        $region60: #{tpu_custom_call.1} parent=55 // pred_fallthru
          _
      $region56: #{tpu_custom_call.1} parent=5 // pred_fallthru
        _
    $region6: #{tpu_custom_call.1} parent=1 // loop_footer
      %s22 = sadd.s32 1, %s18
    $region7: #{tpu_custom_call.1} parent=1 // loop_footer_branch
      %17 = sbr.rel target = $region3
    $region8: #{tpu_custom_call.1} parent=1 // loop_exit
      _
    %1094 = vsyncpa [#allocation4], 1
    %s1095 = scalar_lea.sflag [#allocation4], 1
    %1096 = vsyncpa %s1095, 1

</llo_original>
